<compile_context>
chip_gen: v6e
topology: v6e:2x2x1
jax: 0.10.0
libtpu: 0.0.40
codegen_flags: <defaults>
</compile_context>

<pallas_src>
import jax
import jax.numpy as jnp
from jax.experimental import pallas as pl
from jax.experimental.pallas import tpu as pltpu


# ---------------------------------------------------------------------------
# Pallas kernel: one batch tile per grid step, weights resident in VMEM.
# All activations are laid out [features, batch_tile] (batch on the lane axis).
# ---------------------------------------------------------------------------
def critic_twin_kernel(x_ref, w0_ref, b0_ref, w1_ref, b1_ref, w2_ref, out_ref):
    # Layer 0: relu(W0 @ x + b0)                                  -> [H0, TB]
    h = (jnp.dot(w0_ref[...], x_ref[...], preferred_element_type=jnp.float32)
         + b0_ref[...])
    h = jnp.maximum(h, 0.0)

    # Layer 1: relu(W1 @ h + b1)                                  -> [H1, TB]
    h = (jnp.dot(w1_ref[...], h.astype(w1_ref.dtype),
                 preferred_element_type=jnp.float32)
         + b1_ref[...])
    h = jnp.maximum(h, 0.0)

    # Fused final layer: (mean_e W2) @ h                          -> [1, TB]
    # (mean_e(b2) is added in the wrapper.)
    out_ref[...] = jnp.dot(w2_ref[...], h.astype(w2_ref.dtype),
                           preferred_element_type=jnp.float32)


def critic_twin_forward(state, action, params, *, batch_tile=2048, use_bf16=True):
    """forward() of CriticTwin (ensemble-mean Q value).

    `params` are PyTorch-native layouts: W [out, in], b [out].
    Returns [B, 1] float32.
    """
    w0, b0, w1, b1, w2, b2 = params
    B, S = state.shape
    A = action.shape[1]
    F = S + A
    H0 = w0.shape[0]
    H1 = w1.shape[0]

    in_dtype = jnp.bfloat16 if use_bf16 else jnp.float32

    # ---- wrapper-side layout plumbing (single fused op: concat + T + cast) --
    x_t = jnp.concatenate([state, action], axis=1).T.astype(in_dtype)   # [F, B]

    w0c = w0.astype(in_dtype)                            # [H0, F]
    w1c = w1.astype(in_dtype)                            # [H1, H0]
    b0c = b0.reshape(H0, 1).astype(jnp.float32)          # biases stay f32
    b1c = b1.reshape(H1, 1).astype(jnp.float32)
    # Algebraic fusion of the last Linear + ensemble mean (see header note).
    w2_eff = jnp.mean(w2, axis=0, keepdims=True).astype(in_dtype)   # [1, H1]
    b2_eff = jnp.mean(b2).astype(jnp.float32)                       # scalar

    # ---- batch tiling --------------------------------------------------------
    # Big tiles to amortize per-step overhead, floored to a multiple of 128,
    # but capped so we keep >=2 grid steps whenever B > 128 (v7x megacore).
    if B <= 128:
        tb = B                                            # single full block
    else:
        bt = max(128, (int(batch_tile) // 128) * 128)     # enforce x128 multiple
        half = 128 * pl.cdiv(pl.cdiv(B, 2), 128)          # <= half the batch
        tb = int(min(bt, half))
    grid = (pl.cdiv(B, tb),)

    def resident(shape):
        # Constant block index: parameter DMA'd once, stays in VMEM across steps.
        zeros = (0,) * len(shape)
        return pl.BlockSpec(shape, lambda i: zeros)

    itemsize = jnp.dtype(in_dtype).itemsize
    flops = 2 * B * (H0 * F + H1 * H0 + H1)
    bytes_accessed = (B * F * itemsize + B * 4                       # x in, q out
                      + (H0 * F + H1 * H0 + H1) * itemsize           # weights
                      + (H0 + H1) * 4)                               # biases
    cost = pl.CostEstimate(flops=int(flops), transcendentals=0,
                           bytes_accessed=int(bytes_accessed))

    out = pl.pallas_call(
        critic_twin_kernel,
        out_shape=jax.ShapeDtypeStruct((1, B), jnp.float32),
        grid=grid,
        in_specs=[
            pl.BlockSpec((F, tb), lambda i: (0, i)),      # x tile   [F, TB]
            resident((H0, F)),                            # W0
            resident((H0, 1)),                            # b0
            resident((H1, H0)),                           # W1
            resident((H1, 1)),                            # b1
            resident((1, H1)),                            # mean_e(W2)
        ],
        out_specs=pl.BlockSpec((1, tb), lambda i: (0, i)),
        compiler_params=pltpu.CompilerParams(
            dimension_semantics=("parallel",)),
        cost_estimate=cost,
    )(x_t, w0c, b0c, w1c, b1c, w2_eff)

    # Scalar ensemble-mean bias added outside the kernel (one fewer DMA stream).
    return out.reshape(B, 1) + b2_eff


# ---------------------------------------------------------------------------
# Deterministic parameter init (PyTorch-native [out, in] layout, like __init__)
# ---------------------------------------------------------------------------
def orthogonal(key, rows, cols, std=1.0):
    """Deterministic orthogonal init (QR of a Gaussian), like th.nn.init.orthogonal_."""
    n = max(rows, cols)
    a = jax.random.normal(key, (n, n), dtype=jnp.float32)
    q, r = jnp.linalg.qr(a)
    q = q * jnp.sign(jnp.diagonal(r))
    return (std * q[:rows, :cols]).astype(jnp.float32)


def init_critic_twin_params(key, state_dim, action_dim, net_dims, num_ensembles):
    dims = [state_dim + action_dim, *net_dims, num_ensembles]
    keys = jax.random.split(key, len(dims) - 1)
    params = []
    for i in range(len(dims) - 1):
        fan_in, fan_out = dims[i], dims[i + 1]
        if i == len(dims) - 2:
            # last layer: orthogonal(std=0.5), bias = 1e-6
            w = orthogonal(keys[i], fan_out, fan_in, std=0.5)       # [out, in]
            b = jnp.full((fan_out,), 1e-6, dtype=jnp.float32)
        else:
            # hidden layers: nn.Linear default uniform(+-1/sqrt(fan_in))
            bound = 1.0 / jnp.sqrt(float(fan_in))
            wk, bk = jax.random.split(keys[i])
            w = jax.random.uniform(wk, (fan_out, fan_in), jnp.float32, -bound, bound)
            b = jax.random.uniform(bk, (fan_out,), jnp.float32, -bound, bound)
        params.extend([w, b])
    return tuple(params)


# ---------------------------------------------------------------------------
# Pure-JAX reference (un-fused: concat, full W2, explicit ensemble mean)
# ---------------------------------------------------------------------------
def critic_twin_ref(state, action, params):
    w0, b0, w1, b1, w2, b2 = params
    x = jnp.concatenate([state, action], axis=1)
    h = jnp.maximum(x @ w0.T + b0, 0.0)
    h = jnp.maximum(h @ w1.T + b1, 0.0)
    q = h @ w2.T + b2
    return jnp.mean(q, axis=-1, keepdims=True)


if __name__ == "__main__":
    state_dim = 12
    action_dim = 4
    net_dims = [32, 32]
    num_ensembles = 8

    key = jax.random.PRNGKey(0)
    k_params, k_s1, k_a1, k_s2, k_a2, k_s3, k_a3 = jax.random.split(key, 7)
    params = init_critic_twin_params(k_params, state_dim, action_dim,
                                     net_dims, num_ensembles)

    # Case 1: B not a multiple of the tile -> multi-step grid + padded last block.
    b1 = 300
    state1 = jax.random.normal(k_s1, (b1, state_dim), dtype=jnp.float32)
    action1 = jax.random.normal(k_a1, (b1, action_dim), dtype=jnp.float32)
    out1 = jax.block_until_ready(
        critic_twin_forward(state1, action1, params, batch_tile=128))
    ref1 = critic_twin_ref(state1, action1, params)
    assert out1.shape == (b1, 1), out1.shape
    assert jnp.allclose(out1, ref1, atol=2e-2, rtol=2e-2), \
        float(jnp.max(jnp.abs(out1 - ref1)))

    # Case 2: small batch -> single full-block path (tb == B), bf16 default.
    b2 = 8
    state2 = jax.random.normal(k_s2, (b2, state_dim), dtype=jnp.float32)
    action2 = jax.random.normal(k_a2, (b2, action_dim), dtype=jnp.float32)
    out2 = jax.block_until_ready(critic_twin_forward(state2, action2, params))
    ref2 = critic_twin_ref(state2, action2, params)
    assert out2.shape == (b2, 1), out2.shape
    assert jnp.allclose(out2, ref2, atol=2e-2, rtol=2e-2), \
        float(jnp.max(jnp.abs(out2 - ref2)))

    # Case 3: f32 fallback path, multi-step grid (>=2 steps for v7x), tight tol.
    b3 = 256
    state3 = jax.random.normal(k_s3, (b3, state_dim), dtype=jnp.float32)
    action3 = jax.random.normal(k_a3, (b3, action_dim), dtype=jnp.float32)
    out3 = jax.block_until_ready(
        critic_twin_forward(state3, action3, params, use_bf16=False))
    ref3 = critic_twin_ref(state3, action3, params)
    assert out3.shape == (b3, 1), out3.shape
    assert jnp.allclose(out3, ref3, atol=1e-4, rtol=1e-4), \
        float(jnp.max(jnp.abs(out3 - ref3)))

    print("KERNEL_OK")
</pallas_src>

<mosaic_0001>
module attributes {stable_mosaic.version = 11 : i64} {
  func.func @critic_twin_kernel(%arg0: i32, %arg1: memref<16x128xbf16, #tpu.memory_space<vmem>>, %arg2: memref<32x16xbf16, #tpu.memory_space<vmem>>, %arg3: memref<32x1xf32, #tpu.memory_space<vmem>>, %arg4: memref<32x32xbf16, #tpu.memory_space<vmem>>, %arg5: memref<32x1xf32, #tpu.memory_space<vmem>>, %arg6: memref<1x32xbf16, #tpu.memory_space<vmem>>, %arg7: memref<1x128xf32, #tpu.memory_space<vmem>>) attributes {dimension_semantics = [#tpu.dimension_semantics<parallel>], iteration_bounds = array<i64: 3>, scalar_prefetch = 0 : i64, scratch_operands = 0 : i64, tpu.core_type = #tpu.core_type<tc>, window_params = [{transform_indices = @transform_0, window_bounds = array<i64: 16, 128>}, {pipeline_mode = #tpu.pipeline_mode<synchronous>, transform_indices = @transform_1, window_bounds = array<i64: 32, 16>}, {pipeline_mode = #tpu.pipeline_mode<synchronous>, transform_indices = @transform_2, window_bounds = array<i64: 32, 1>}, {pipeline_mode = #tpu.pipeline_mode<synchronous>, transform_indices = @transform_3, window_bounds = array<i64: 32, 32>}, {pipeline_mode = #tpu.pipeline_mode<synchronous>, transform_indices = @transform_4, window_bounds = array<i64: 32, 1>}, {pipeline_mode = #tpu.pipeline_mode<synchronous>, transform_indices = @transform_5, window_bounds = array<i64: 1, 32>}, {transform_indices = @transform_6, window_bounds = array<i64: 1, 128>}]} {
    %c0 = arith.constant 0 : index
    %c0_0 = arith.constant 0 : index
    %0 = vector.load %arg2[%c0, %c0_0] : memref<32x16xbf16, #tpu.memory_space<vmem>>, vector<32x16xbf16>
    %c0_1 = arith.constant 0 : index
    %c0_2 = arith.constant 0 : index
    %1 = vector.load %arg1[%c0_1, %c0_2] : memref<16x128xbf16, #tpu.memory_space<vmem>>, vector<16x128xbf16>
    %cst = arith.constant dense<0.000000e+00> : vector<32x128xf32>
    %2 = tpu.matmul %0, %1, %cst {dimension_numbers = #tpu.dot_dimension_numbers<[1], [0], [0], [1], [0, 0, 1, 1], [], []>} : vector<32x16xbf16>, vector<16x128xbf16>, vector<32x128xf32> -> vector<32x128xf32>
    %c0_3 = arith.constant 0 : index
    %c0_4 = arith.constant 0 : index
    %3 = vector.load %arg3[%c0_3, %c0_4] : memref<32x1xf32, #tpu.memory_space<vmem>>, vector<32x1xf32>
    %4 = vector.broadcast %3 : vector<32x1xf32> to vector<32x128xf32>
    %5 = arith.addf %2, %4 : vector<32x128xf32>
    %cst_5 = arith.constant 0.000000e+00 : f32
    %6 = vector.broadcast %cst_5 : f32 to vector<32x128xf32>
    %7 = arith.maximumf %5, %6 : vector<32x128xf32>
    %c0_6 = arith.constant 0 : index
    %c0_7 = arith.constant 0 : index
    %8 = vector.load %arg4[%c0_6, %c0_7] : memref<32x32xbf16, #tpu.memory_space<vmem>>, vector<32x32xbf16>
    %9 = arith.truncf %7 : vector<32x128xf32> to vector<32x128xbf16>
    %cst_8 = arith.constant dense<0.000000e+00> : vector<32x128xf32>
    %10 = tpu.matmul %8, %9, %cst_8 {dimension_numbers = #tpu.dot_dimension_numbers<[1], [0], [0], [1], [0, 0, 1, 1], [], []>} : vector<32x32xbf16>, vector<32x128xbf16>, vector<32x128xf32> -> vector<32x128xf32>
    %c0_9 = arith.constant 0 : index
    %c0_10 = arith.constant 0 : index
    %11 = vector.load %arg5[%c0_9, %c0_10] : memref<32x1xf32, #tpu.memory_space<vmem>>, vector<32x1xf32>
    %12 = vector.broadcast %11 : vector<32x1xf32> to vector<32x128xf32>
    %13 = arith.addf %10, %12 : vector<32x128xf32>
    %cst_11 = arith.constant 0.000000e+00 : f32
    %14 = vector.broadcast %cst_11 : f32 to vector<32x128xf32>
    %15 = arith.maximumf %13, %14 : vector<32x128xf32>
    %c0_12 = arith.constant 0 : index
    %c0_13 = arith.constant 0 : index
    %16 = vector.load %arg6[%c0_12, %c0_13] : memref<1x32xbf16, #tpu.memory_space<vmem>>, vector<1x32xbf16>
    %17 = arith.truncf %15 : vector<32x128xf32> to vector<32x128xbf16>
    %cst_14 = arith.constant dense<0.000000e+00> : vector<1x128xf32>
    %18 = tpu.matmul %16, %17, %cst_14 {dimension_numbers = #tpu.dot_dimension_numbers<[1], [0], [0], [1], [0, 0, 1, 1], [], []>} : vector<1x32xbf16>, vector<32x128xbf16>, vector<1x128xf32> -> vector<1x128xf32>
    %c0_15 = arith.constant 0 : index
    %c0_16 = arith.constant 0 : index
    %19 = vector.load %arg7[%c0_15, %c0_16] : memref<1x128xf32, #tpu.memory_space<vmem>>, vector<1x128xf32>
    tpu.vector_store %arg7[%c0_15, %c0_16], %18 {strides = array<i32>} : memref<1x128xf32, #tpu.memory_space<vmem>>, vector<1x128xf32>,
    return
  }
  func.func @transform_0(%arg0: i32) -> (i32, i32) {
    %c0_i32 = arith.constant 0 : i32
    %c0_i32_0 = arith.constant 0 : i32
    return %c0_i32, %arg0 : i32, i32
  }
  func.func @transform_1(%arg0: i32) -> (i32, i32) {
    %c0_i32 = arith.constant 0 : i32
    %c0_i32_0 = arith.constant 0 : i32
    %c0_i32_1 = arith.constant 0 : i32
    return %c0_i32, %c0_i32_0 : i32, i32
  }
  func.func @transform_2(%arg0: i32) -> (i32, i32) {
    %c0_i32 = arith.constant 0 : i32
    %c0_i32_0 = arith.constant 0 : i32
    %c0_i32_1 = arith.constant 0 : i32
    return %c0_i32, %c0_i32_0 : i32, i32
  }
  func.func @transform_3(%arg0: i32) -> (i32, i32) {
    %c0_i32 = arith.constant 0 : i32
    %c0_i32_0 = arith.constant 0 : i32
    %c0_i32_1 = arith.constant 0 : i32
    return %c0_i32, %c0_i32_0 : i32, i32
  }
  func.func @transform_4(%arg0: i32) -> (i32, i32) {
    %c0_i32 = arith.constant 0 : i32
    %c0_i32_0 = arith.constant 0 : i32
    %c0_i32_1 = arith.constant 0 : i32
    return %c0_i32, %c0_i32_0 : i32, i32
  }
  func.func @transform_5(%arg0: i32) -> (i32, i32) {
    %c0_i32 = arith.constant 0 : i32
    %c0_i32_0 = arith.constant 0 : i32
    %c0_i32_1 = arith.constant 0 : i32
    return %c0_i32, %c0_i32_0 : i32, i32
  }
  func.func @transform_6(%arg0: i32) -> (i32, i32) {
    %c0_i32 = arith.constant 0 : i32
    %c0_i32_0 = arith.constant 0 : i32
    return %c0_i32, %arg0 : i32, i32
  }
}

</mosaic_0001>

<llo_original>
// kernel: tpu_custom_call.1
$region0: #{tpu_custom_call.1}
  #allocation0 [shape = 'u32[]', space=smem, size = 0x4, offset = 0x4, fixed_abs, tag = 'smem constant byte address 0x4 - core index']
  #allocation1 [shape = 'u32[144,128]{1,0:T(1,128)}', space=vmem, size = 0x12000, scoped, tag = 'internal scratch']
  %s0 = inlined_call_operand.vmem [shape: bf16[16,300], index: 0, kind: input, shape index: {}]
  %s1 = inlined_call_operand.vmem [shape: bf16[32,16], index: 1, kind: input, shape index: {}]
  %s2 = inlined_call_operand.vmem [shape: f32[32,1], index: 2, kind: input, shape index: {}]
  %s3 = inlined_call_operand.vmem [shape: bf16[32,32], index: 3, kind: input, shape index: {}]
  %s4 = inlined_call_operand.vmem [shape: f32[32,1], index: 4, kind: input, shape index: {}]
  %s5 = inlined_call_operand.vmem [shape: bf16[1,32], index: 5, kind: input, shape index: {}]
  %s6 = inlined_call_operand.hbm [shape: f32[1,300], index: 6, kind: output, shape index: {}]
  %s7 = sld [smem:[#allocation0]]
  $region98: #{tpu_custom_call.1} parent=0
    _
  %s9 = ssub.s32 1, %s7
  %s10 = scalar_select 0, %s9, %s7
  $region1: #{tpu_custom_call.1} parent=0
    #allocation2 [shape = 'u8[8192]{0}', space=vmem, size = 0x2000, scoped, tag = 'input window, operand 0']
    #allocation3 [shape = 'u8[1024]{0}', space=vmem, size = 0x400, scoped, tag = 'output window, operand 0']
    #allocation4 [shape = 's32[2]{0}', space=sflag, size = 0x8, scoped, tag = 'scoped memory for tpu_custom_call.1']
    %11 = vsyncpa [#allocation4], 0
    %s12 = scalar_lea.sflag [#allocation4], 1
    %13 = vsyncpa %s12, 0
    loop: start=0, step=1, limit=5
    $region2: #{tpu_custom_call.1} parent=1 // loop_pre_header
      _
    $region3: #{tpu_custom_call.1} parent=1 // loop_header
      %s15 = sphi 0, %s19
      %p16 = scmp.ge.s32.totalorder %s15, 5
      %s25 = sphi 0, %s27
      %s28 = sphi 0, %s25
      %s29 = sphi 0, %s28
      %s45 = sphi 0, %s29
      %s49 = sphi 0, %s49
      %s51 = sphi 0, %s49
      %s52 = sphi 0, %s51
      %s66 = sphi 0, %s52
      %s70 = sphi 0, %s70
      %s72 = sphi 0, %s70
      %s73 = sphi 0, %s72
      %s87 = sphi 0, %s73
      %s91 = sphi 0, %s91
      %s93 = sphi 0, %s91
      %s94 = sphi 0, %s93
      %s108 = sphi 0, %s94
      %s112 = sphi 0, %s112
      %s114 = sphi 0, %s112
      %s115 = sphi 0, %s114
      %s129 = sphi 0, %s115
      %s133 = sphi 0, %s133
      %s135 = sphi 0, %s133
      %s136 = sphi 0, %s135
      %s150 = sphi 0, %s136
      %s156 = sphi 0, %s158
      %s159 = sphi 0, %s156
      %s160 = sphi 0, %s159
      %s176 = sphi 0, %s160
    $region4: #{tpu_custom_call.1} parent=1 // loop_header_branch
      %18 = sbr.rel (%p16) target = $region8
    $region5: #{tpu_custom_call.1} parent=1 // loop_body
      %s20 = ssub.s32 %s15, 1
      %s21 = ssub.s32 %s15, 2
      %s22 = sadd.s32 %s15, 1
      %s23 = ssub.s32 %s15, %s22
      %p24 = scmp.eq.s32.totalorder %s23, 0
      %s26 = sadd.s32 %s25, 1
      %s27 = scalar_select %p24, %s25, %s26
      %p30 = pneg %p24
      %p31 = scmp.eq.s32.totalorder %s15, 2
      %p32 = por %p30, %p31
      %p33 = scmp.ne.s32.totalorder %s25, %s28
      %p34 = scmp.eq.s32.totalorder %s15, 0
      %p35 = por %p33, %p34
      %p36 = scmp.ne.s32.totalorder %s25, %s28
      %p37 = scmp.eq.s32.totalorder %s20, 2
      %p38 = por %p36, %p37
      %p39 = scmp.ne.s32.totalorder %s28, %s29
      %p40 = scmp.eq.s32.totalorder %s20, 0
      %p41 = por %p39, %p40
      %p42 = scmp.ne.s32.totalorder %s28, %s29
      %p43 = scmp.eq.s32.totalorder %s21, 2
      %p44 = por %p42, %p43
      %p46 = scmp.ne.s32.totalorder %s29, %s45
      %p47 = scmp.eq.s32.totalorder %s21, 0
      %p48 = por %p46, %p47
      %s50 = sadd.s32 %s49, 1
      %p53 = scmp.eq.s32.totalorder %s15, 2
      %p54 = scmp.ne.s32.totalorder %s49, %s51
      %p55 = scmp.eq.s32.totalorder %s15, 0
      %p56 = por %p54, %p55
      %p57 = scmp.ne.s32.totalorder %s49, %s51
      %p58 = scmp.eq.s32.totalorder %s20, 2
      %p59 = por %p57, %p58
      %p60 = scmp.ne.s32.totalorder %s51, %s52
      %p61 = scmp.eq.s32.totalorder %s20, 0
      %p62 = por %p60, %p61
      %p63 = scmp.ne.s32.totalorder %s51, %s52
      %p64 = scmp.eq.s32.totalorder %s21, 2
      %p65 = por %p63, %p64
      %p67 = scmp.ne.s32.totalorder %s52, %s66
      %p68 = scmp.eq.s32.totalorder %s21, 0
      %p69 = por %p67, %p68
      %s71 = sadd.s32 %s70, 1
      %p74 = scmp.eq.s32.totalorder %s15, 2
      %p75 = scmp.ne.s32.totalorder %s70, %s72
      %p76 = scmp.eq.s32.totalorder %s15, 0
      %p77 = por %p75, %p76
      %p78 = scmp.ne.s32.totalorder %s70, %s72
      %p79 = scmp.eq.s32.totalorder %s20, 2
      %p80 = por %p78, %p79
      %p81 = scmp.ne.s32.totalorder %s72, %s73
      %p82 = scmp.eq.s32.totalorder %s20, 0
      %p83 = por %p81, %p82
      %p84 = scmp.ne.s32.totalorder %s72, %s73
      %p85 = scmp.eq.s32.totalorder %s21, 2
      %p86 = por %p84, %p85
      %p88 = scmp.ne.s32.totalorder %s73, %s87
      %p89 = scmp.eq.s32.totalorder %s21, 0
      %p90 = por %p88, %p89
      %s92 = sadd.s32 %s91, 1
      %p95 = scmp.eq.s32.totalorder %s15, 2
      %p96 = scmp.ne.s32.totalorder %s91, %s93
      %p97 = scmp.eq.s32.totalorder %s15, 0
      %p98 = por %p96, %p97
      %p99 = scmp.ne.s32.totalorder %s91, %s93
      %p100 = scmp.eq.s32.totalorder %s20, 2
      %p101 = por %p99, %p100
      %p102 = scmp.ne.s32.totalorder %s93, %s94
      %p103 = scmp.eq.s32.totalorder %s20, 0
      %p104 = por %p102, %p103
      %p105 = scmp.ne.s32.totalorder %s93, %s94
      %p106 = scmp.eq.s32.totalorder %s21, 2
      %p107 = por %p105, %p106
      %p109 = scmp.ne.s32.totalorder %s94, %s108
      %p110 = scmp.eq.s32.totalorder %s21, 0
      %p111 = por %p109, %p110
      %s113 = sadd.s32 %s112, 1
      %p116 = scmp.eq.s32.totalorder %s15, 2
      %p117 = scmp.ne.s32.totalorder %s112, %s114
      %p118 = scmp.eq.s32.totalorder %s15, 0
      %p119 = por %p117, %p118
      %p120 = scmp.ne.s32.totalorder %s112, %s114
      %p121 = scmp.eq.s32.totalorder %s20, 2
      %p122 = por %p120, %p121
      %p123 = scmp.ne.s32.totalorder %s114, %s115
      %p124 = scmp.eq.s32.totalorder %s20, 0
      %p125 = por %p123, %p124
      %p126 = scmp.ne.s32.totalorder %s114, %s115
      %p127 = scmp.eq.s32.totalorder %s21, 2
      %p128 = por %p126, %p127
      %p130 = scmp.ne.s32.totalorder %s115, %s129
      %p131 = scmp.eq.s32.totalorder %s21, 0
      %p132 = por %p130, %p131
      %s134 = sadd.s32 %s133, 1
      %p137 = scmp.eq.s32.totalorder %s15, 2
      %p138 = scmp.ne.s32.totalorder %s133, %s135
      %p139 = scmp.eq.s32.totalorder %s15, 0
      %p140 = por %p138, %p139
      %p141 = scmp.ne.s32.totalorder %s133, %s135
      %p142 = scmp.eq.s32.totalorder %s20, 2
      %p143 = por %p141, %p142
      %p144 = scmp.ne.s32.totalorder %s135, %s136
      %p145 = scmp.eq.s32.totalorder %s20, 0
      %p146 = por %p144, %p145
      %p147 = scmp.ne.s32.totalorder %s135, %s136
      %p148 = scmp.eq.s32.totalorder %s21, 2
      %p149 = por %p147, %p148
      %p151 = scmp.ne.s32.totalorder %s136, %s150
      %p152 = scmp.eq.s32.totalorder %s21, 0
      %p153 = por %p151, %p152
      %s154 = ssub.s32 %s15, %s22
      %p155 = scmp.eq.s32.totalorder %s154, 0
      %s157 = sadd.s32 %s156, 1
      %s158 = scalar_select %p155, %s156, %s157
      %p161 = pneg %p155
      %p162 = scmp.eq.s32.totalorder %s15, 2
      %p163 = por %p161, %p162
      %p164 = scmp.ne.s32.totalorder %s156, %s159
      %p165 = scmp.eq.s32.totalorder %s15, 0
      %p166 = por %p164, %p165
      %p167 = scmp.ne.s32.totalorder %s156, %s159
      %p168 = scmp.eq.s32.totalorder %s20, 2
      %p169 = por %p167, %p168
      %p170 = scmp.ne.s32.totalorder %s159, %s160
      %p171 = scmp.eq.s32.totalorder %s20, 0
      %p172 = por %p170, %p171
      %p173 = scmp.ne.s32.totalorder %s159, %s160
      %p174 = scmp.eq.s32.totalorder %s21, 2
      %p175 = por %p173, %p174
      %p177 = scmp.ne.s32.totalorder %s160, %s176
      %p178 = scmp.eq.s32.totalorder %s21, 0
      %p179 = por %p177, %p178
      %p180 = scmp.le.s32.totalorder 1, %s15
      %p181 = scmp.lt.s32.totalorder %s15, 4
      %p182 = pnand %p180, %p181
      %p183 = pneg %p182
      // Predicated region
      $region9: #{tpu_custom_call.1} parent=5 // pred_check
        _
      $region10: #{tpu_custom_call.1} parent=5 // pred_check_branch
        %185 = sbr.rel (%p182) target = $region12
      $region11: #{tpu_custom_call.1} parent=5 // pred_region
        %s186 = ssub.s32 %s15, 1
        // Predicated region
        $region13: #{tpu_custom_call.1} parent=11 // pred_check
          %p187 = pneg %p62
        $region14: #{tpu_custom_call.1} parent=11 // pred_check_branch
          %189 = sbr.rel (%p187) target = $region16
        $region15: #{tpu_custom_call.1} parent=11 // pred_region
          _
        $region16: #{tpu_custom_call.1} parent=11 // pred_fallthru
          _
        // Predicated region
        $region17: #{tpu_custom_call.1} parent=11 // pred_check
          %p190 = pneg %p83
        $region18: #{tpu_custom_call.1} parent=11 // pred_check_branch
          %192 = sbr.rel (%p190) target = $region20
        $region19: #{tpu_custom_call.1} parent=11 // pred_region
          _
        $region20: #{tpu_custom_call.1} parent=11 // pred_fallthru
          _
        // Predicated region
        $region21: #{tpu_custom_call.1} parent=11 // pred_check
          %p193 = pneg %p104
        $region22: #{tpu_custom_call.1} parent=11 // pred_check_branch
          %195 = sbr.rel (%p193) target = $region24
        $region23: #{tpu_custom_call.1} parent=11 // pred_region
          _
        $region24: #{tpu_custom_call.1} parent=11 // pred_fallthru
          _
        // Predicated region
        $region25: #{tpu_custom_call.1} parent=11 // pred_check
          %p196 = pneg %p125
        $region26: #{tpu_custom_call.1} parent=11 // pred_check_branch
          %198 = sbr.rel (%p196) target = $region28
        $region27: #{tpu_custom_call.1} parent=11 // pred_region
          _
        $region28: #{tpu_custom_call.1} parent=11 // pred_fallthru
          _
        // Predicated region
        $region29: #{tpu_custom_call.1} parent=11 // pred_check
          %p199 = pneg %p146
        $region30: #{tpu_custom_call.1} parent=11 // pred_check_branch
          %201 = sbr.rel (%p199) target = $region32
        $region31: #{tpu_custom_call.1} parent=11 // pred_region
          _
        $region32: #{tpu_custom_call.1} parent=11 // pred_fallthru
          _
      $region12: #{tpu_custom_call.1} parent=5 // pred_fallthru
        _
      %p202 = scmp.lt.s32.totalorder %s15, 3
      // Predicated region
      $region33: #{tpu_custom_call.1} parent=5 // pred_check
        %p203 = pneg %p202
      $region34: #{tpu_custom_call.1} parent=5 // pred_check_branch
        %205 = sbr.rel (%p203) target = $region36
      $region35: #{tpu_custom_call.1} parent=5 // pred_region
        // Predicated region
        $region37: #{tpu_custom_call.1} parent=35 // pred_check
          %p206 = pneg %p35
        $region38: #{tpu_custom_call.1} parent=35 // pred_check_branch
          %208 = sbr.rel (%p206) target = $region40
        $region39: #{tpu_custom_call.1} parent=35 // pred_region
          %s209 = sand.u32 %s25, 1
          %s210 = sand.u32 %s25, 1
          %s211 = smul.addr %s210, 8
          %s212 = scalar_lea.vmem [#allocation2], %s211
          %s213 = smul.addr %s15, 4
          %s214 = scalar_lea.vmem %s0, %s213
          // Predicated region
          $region41: #{tpu_custom_call.1} parent=39 // pred_check
            _
          $region42: #{tpu_custom_call.1} parent=39 // pred_check_branch
            %216 = sbr.rel (0) target = $region44
          $region43: #{tpu_custom_call.1} parent=39 // pred_region
            // Predicated region
            $region45: #{tpu_custom_call.1} parent=43 // pred_check
              _
            $region46: #{tpu_custom_call.1} parent=43 // pred_check_branch
              %218 = sbr.rel target = $region48
            $region47: #{tpu_custom_call.1} parent=43 // pred_region
              // Predicated region
              $region60: #{tpu_custom_call.1} parent=47 // pred_check
                _
              $region61: #{tpu_custom_call.1} parent=47 // pred_check_branch
                %236 = sbr.rel (0) target = $region63
              $region62: #{tpu_custom_call.1} parent=47 // pred_region
                loop: start=0, step=1, limit=1
                $region64: #{tpu_custom_call.1} parent=62 // loop_pre_header
                  _
                $region65: #{tpu_custom_call.1} parent=62 // loop_header
                  %s238 = sphi 0, %s242
                  %p239 = scmp.ge.s32.totalorder %s238, 1
                  %s243 = sphi %s214, %s214
                  %s244 = sphi %s212, %s212
                $region66: #{tpu_custom_call.1} parent=62 // loop_header_branch
                  %241 = sbr.rel (%p239) target = $region70
                $region67: #{tpu_custom_call.1} parent=62 // loop_body
                  _
                $region68: #{tpu_custom_call.1} parent=62 // loop_footer
                  %s242 = sadd.s32 1, %s238
                $region69: #{tpu_custom_call.1} parent=62 // loop_footer_branch
                  %237 = sbr.rel target = $region65
                $region70: #{tpu_custom_call.1} parent=62 // loop_exit
                  _
                %s246 = ssub.s32 16, 1
                loop: start=0, step=1, limit=1
                $region71: #{tpu_custom_call.1} parent=62 // loop_pre_header
                  _
                $region72: #{tpu_custom_call.1} parent=62 // loop_header
                  %s248 = sphi 0, %s252
                  %p249 = scmp.ge.s32.totalorder %s248, 1
                  %s253 = sphi %s214, %s214
                  %s254 = sphi %s212, %s212
                $region73: #{tpu_custom_call.1} parent=62 // loop_header_branch
                  %251 = sbr.rel (%p249) target = $region77
                $region74: #{tpu_custom_call.1} parent=62 // loop_body
                  %v255 = vld [vmem:[%s253] sm:%s246]
                  %256 = vst [vmem:[%s254] sm:%s246] %v255
                  %v257 = vld [vmem:[%s253 + $0xc] sm:%s246]
                  %258 = vst [vmem:[%s254 + $0x4] sm:%s246] %v257
                $region75: #{tpu_custom_call.1} parent=62 // loop_footer
                  %s252 = sadd.s32 1, %s248
                $region76: #{tpu_custom_call.1} parent=62 // loop_footer_branch
                  %247 = sbr.rel target = $region72
                $region77: #{tpu_custom_call.1} parent=62 // loop_exit
                  _
              $region63: #{tpu_custom_call.1} parent=47 // pred_fallthru
                _
            $region48: #{tpu_custom_call.1} parent=43 // pred_fallthru
              _
            // Predicated region
            $region49: #{tpu_custom_call.1} parent=43 // pred_check
              _
            $region50: #{tpu_custom_call.1} parent=43 // pred_check_branch
              %220 = sbr.rel (0) target = $region52
            $region51: #{tpu_custom_call.1} parent=43 // pred_region
              %s222 = ssub.s32 16, 1
              loop: start=0, step=1, limit=1
              $region53: #{tpu_custom_call.1} parent=51 // loop_pre_header
                _
              $region54: #{tpu_custom_call.1} parent=51 // loop_header
                %s224 = sphi 0, %s228
                %p225 = scmp.ge.s32.totalorder %s224, 1
                %s229 = sphi %s214, %s214
                %s230 = sphi %s212, %s212
              $region55: #{tpu_custom_call.1} parent=51 // loop_header_branch
                %227 = sbr.rel (%p225) target = $region59
              $region56: #{tpu_custom_call.1} parent=51 // loop_body
                %v231 = vld [vmem:[%s229] sm:%s222]
                %232 = vst [vmem:[%s230] sm:%s222] %v231
                %v233 = vld [vmem:[%s229 + $0xc] sm:%s222]
                %234 = vst [vmem:[%s230 + $0x4] sm:%s222] %v233
              $region57: #{tpu_custom_call.1} parent=51 // loop_footer
                %s228 = sadd.s32 1, %s224
              $region58: #{tpu_custom_call.1} parent=51 // loop_footer_branch
                %223 = sbr.rel target = $region54
              $region59: #{tpu_custom_call.1} parent=51 // loop_exit
                _
            $region52: #{tpu_custom_call.1} parent=43 // pred_fallthru
              _
          $region44: #{tpu_custom_call.1} parent=39 // pred_fallthru
            _
          %259 = vnop
        $region40: #{tpu_custom_call.1} parent=35 // pred_fallthru
          _
      $region36: #{tpu_custom_call.1} parent=5 // pred_fallthru
        _
      %p260 = scmp.le.s32.totalorder 1, %s15
      %p261 = scmp.lt.s32.totalorder %s15, 4
      %p262 = pnand %p260, %p261
      %p263 = pneg %p262
      // Predicated region
      $region78: #{tpu_custom_call.1} parent=5 // pred_check
        _
      $region79: #{tpu_custom_call.1} parent=5 // pred_check_branch
        %265 = sbr.rel (%p262) target = $region81
      $region80: #{tpu_custom_call.1} parent=5 // pred_region
        %s266 = ssub.s32 %s15, 1
        %s267 = sand.u32 %s28, 1
        %s268 = sand.u32 %s28, 1
        %s269 = smul.addr %s268, 8
        %s270 = scalar_lea.vmem [#allocation2], %s269
        // Predicated region
        $region82: #{tpu_custom_call.1} parent=80 // pred_check
          %p271 = pneg %p41
        $region83: #{tpu_custom_call.1} parent=80 // pred_check_branch
          %273 = sbr.rel (%p271) target = $region85
        $region84: #{tpu_custom_call.1} parent=80 // pred_region
          _
        $region85: #{tpu_custom_call.1} parent=80 // pred_fallthru
          _
        %s274 = sand.u32 %s28, 1
        %s275 = sand.u32 %s28, 1
        %s276 = smul.addr %s275, 8
        %s277 = scalar_lea.vmem [#allocation2], %s276
        %p278 = pneg %p41
        %p279 = pneg %p38
        %p280 = pneg %p62
        %p281 = pneg %p59
        %p282 = pneg %p83
        %p283 = pneg %p80
        %p284 = pneg %p104
        %p285 = pneg %p101
        %p286 = pneg %p125
        %p287 = pneg %p122
        %p288 = pneg %p146
        %p289 = pneg %p143
        %p290 = pneg %p172
        %p291 = pneg %p169
        %s292 = sand.u32 %s159, 1
        %s293 = scalar_lea.sflag [#allocation4], %s292
        %s294 = sand.u32 %s159, 1
        %s295 = scalar_lea.vmem [#allocation3], %s294
        %v297 = vld [vmem:[%s1] sm:$0xf]
        %v298 = vld [vmem:[%s1 + $0x4] sm:$0xf]
        %v299 = vld [vmem:[%s1 + $0x8] sm:$0xf]
        %v300 = vld [vmem:[%s1 + $0xc] sm:$0xf]
        %v301 = vld [vmem:[%s270] sm:$0xf]
        %v302 = vld [vmem:[%s270 + $0x4] sm:$0xf]
        %v303 = vld [vmem:[%s2] sm:$0xff]
        %v304 = vld [vmem:[%s2 + $0x8] sm:$0xff]
        %v305 = vld [vmem:[%s2 + $0x10] sm:$0xff]
        %v306 = vld [vmem:[%s2 + $0x18] sm:$0xff]
        %308 = vset.pattern.permute.xlu0 0
        %309 = vperm.xlu0 %308, %v303
        %v310 = vpop.permute.xlu0 %309
        %313 = vset.pattern.permute.xlu0 0
        %314 = vperm.xlu0 %313, %v304
        %v315 = vpop.permute.xlu0 %314
        %318 = vset.pattern.permute.xlu0 0
        %319 = vperm.xlu0 %318, %v305
        %v320 = vpop.permute.xlu0 %319
        %323 = vset.pattern.permute.xlu0 0
        %324 = vperm.xlu0 %323, %v306
        %v325 = vpop.permute.xlu0 %324
        %v331 = vunpack.c.l.b16 %v297
        %v332 = vunpack.c.l.b16 %v298
        %v333 = vunpack.c.l.b16 %v299
        %v334 = vunpack.c.l.b16 %v300
        %v335 = vpack.c.b16 %v332, %v331
        %v336 = vpack.c.b16 %v334, %v333
        %v339 = vunpack.c.l.b16 %v301
        %v340 = vunpack.c.l.b16 %v302
        %v341 = vpack.c.b16 %v340, %v339
        %vm343 = vcmask 130048
        %v345 = vsel %vm343, %v335, 0
        %v348 = vsel %vm343, %v336, 0
        %350 = vmatprep.subr.bf16.mxu0 0
        %351 = vmatpush1.bf16.msra.mxu0 0
        %352 = vmatprep.subr.bf16.mxu0 0
        %353 = vmatpush1.bf16.msra.mxu0 0
        %354 = vmatprep.subr.bf16.mxu0 0
        %355 = vmatpush1.bf16.msra.mxu0 0
        %356 = vmatprep.subr.bf16.mxu0 0
        %357 = vmatpush1.bf16.msra.mxu0 0
        %358 = vmatprep.subr.bf16.mxu0 0
        %359 = vmatpush1.bf16.msra.mxu0 0
        %360 = vmatprep.subr.bf16.mxu0 0
        %361 = vmatpush1.bf16.msra.mxu0 0
        %362 = vmatprep.subr.bf16.mxu0 0
        %363 = vmatpush1.bf16.msra.mxu0 0
        %364 = vmatprep.subr.bf16.mxu0 0
        %365 = vmatpush1.bf16.msra.mxu0 %v341
        %366 = vmatprep.subr.bf16.mxu0 0
        %367 = vmatpush2.bf16.msra.mxu0 0
        %368 = vmatprep.subr.bf16.mxu0 0
        %369 = vmatpush2.bf16.msra.mxu0 0
        %370 = vmatprep.subr.bf16.mxu0 0
        %371 = vmatpush2.bf16.msra.mxu0 0
        %372 = vmatprep.subr.bf16.mxu0 0
        %373 = vmatpush2.bf16.msra.mxu0 0
        %374 = vmatprep.subr.bf16.mxu0 0
        %375 = vmatpush2.bf16.msra.mxu0 0
        %376 = vmatprep.subr.bf16.mxu0 0
        %377 = vmatpush2.bf16.msra.mxu0 0
        %378 = vmatprep.subr.bf16.mxu0 0
        %379 = vmatpush2.bf16.msra.mxu0 0
        %380 = vmatprep.subr.bf16.mxu0 0
        %381 = vmatpush2.bf16.msra.mxu0 0
        %382 = vmatprep.mubr.bf16.mxu0 0
        %383 = vmatmul.mubr.bf16.gmra.mxu0 %v345
        %v384 = vpop.f32.mrf.mxu0
        %v385 = vadd.f32 %v310, %v384
        %v386 = vpop.f32.mrf.mxu0
        %v387 = vpop.f32.mrf.mxu0
        %v388 = vadd.f32 %v315, %v387
        %v389 = vpop.f32.mrf.mxu0
        %390 = vmatprep.mubr.bf16.mxu0 0
        %391 = vmatmul.mubr.bf16.gmra.mxu0 %v348
        %v392 = vpop.f32.mrf.mxu0
        %v393 = vadd.f32 %v320, %v392
        %v394 = vpop.f32.mrf.mxu0
        %v395 = vpop.f32.mrf.mxu0
        %v396 = vadd.f32 %v325, %v395
        %v397 = vpop.f32.mrf.mxu0
        %398 = vdwg.mxu0
        %v399 = vmax.f32 %v385, 0.0
        %v400 = vmax.f32 %v388, 0.0
        %v401 = vmax.f32 %v393, 0.0
        %v402 = vmax.f32 %v396, 0.0
        %v403 = vld [vmem:[%s3] sm:$0xf]
        %v404 = vld [vmem:[%s3 + $0x4] sm:$0xf]
        %v405 = vld [vmem:[%s3 + $0x8] sm:$0xf]
        %v406 = vld [vmem:[%s3 + $0xc] sm:$0xf]
        %v407 = vpack.c.bf16 %v400, %v399
        %v408 = vpack.c.bf16 %v402, %v401
        %v409 = vld [vmem:[%s4] sm:$0xff]
        %v410 = vld [vmem:[%s4 + $0x8] sm:$0xff]
        %v411 = vld [vmem:[%s4 + $0x10] sm:$0xff]
        %v412 = vld [vmem:[%s4 + $0x18] sm:$0xff]
        %414 = vset.pattern.permute.xlu0 0
        %415 = vperm.xlu0 %414, %v409
        %v416 = vpop.permute.xlu0 %415
        %419 = vset.pattern.permute.xlu0 0
        %420 = vperm.xlu0 %419, %v410
        %v421 = vpop.permute.xlu0 %420
        %424 = vset.pattern.permute.xlu0 0
        %425 = vperm.xlu0 %424, %v411
        %v426 = vpop.permute.xlu0 %425
        %429 = vset.pattern.permute.xlu0 0
        %430 = vperm.xlu0 %429, %v412
        %v431 = vpop.permute.xlu0 %430
        %v437 = vunpack.c.l.b16 %v403
        %v438 = vunpack.c.l.b16 %v404
        %v439 = vunpack.c.l.b16 %v405
        %v440 = vunpack.c.l.b16 %v406
        %v441 = vpack.c.b16 %v438, %v437
        %v442 = vpack.c.b16 %v440, %v439
        %vm443 = vcmask 261120
        %v445 = vsel %vm443, %v441, 0
        %v448 = vsel %vm443, %v442, 0
        %450 = vmatprep.subr.bf16.mxu0 0
        %451 = vmatpush1.bf16.msra.mxu0 0
        %452 = vmatprep.subr.bf16.mxu0 0
        %453 = vmatpush1.bf16.msra.mxu0 0
        %454 = vmatprep.subr.bf16.mxu0 0
        %455 = vmatpush1.bf16.msra.mxu0 0
        %456 = vmatprep.subr.bf16.mxu0 0
        %457 = vmatpush1.bf16.msra.mxu0 0
        %458 = vmatprep.subr.bf16.mxu0 0
        %459 = vmatpush1.bf16.msra.mxu0 0
        %460 = vmatprep.subr.bf16.mxu0 0
        %461 = vmatpush1.bf16.msra.mxu0 0
        %462 = vmatprep.subr.bf16.mxu0 0
        %463 = vmatpush1.bf16.msra.mxu0 %v408
        %464 = vmatprep.subr.bf16.mxu0 0
        %465 = vmatpush1.bf16.msra.mxu0 %v407
        %466 = vmatprep.subr.bf16.mxu0 0
        %467 = vmatpush2.bf16.msra.mxu0 0
        %468 = vmatprep.subr.bf16.mxu0 0
        %469 = vmatpush2.bf16.msra.mxu0 0
        %470 = vmatprep.subr.bf16.mxu0 0
        %471 = vmatpush2.bf16.msra.mxu0 0
        %472 = vmatprep.subr.bf16.mxu0 0
        %473 = vmatpush2.bf16.msra.mxu0 0
        %474 = vmatprep.subr.bf16.mxu0 0
        %475 = vmatpush2.bf16.msra.mxu0 0
        %476 = vmatprep.subr.bf16.mxu0 0
        %477 = vmatpush2.bf16.msra.mxu0 0
        %478 = vmatprep.subr.bf16.mxu0 0
        %479 = vmatpush2.bf16.msra.mxu0 0
        %480 = vmatprep.subr.bf16.mxu0 0
        %481 = vmatpush2.bf16.msra.mxu0 0
        %482 = vmatprep.mubr.bf16.mxu0 0
        %483 = vmatmul.mubr.bf16.gmra.mxu0 %v445
        %v484 = vpop.f32.mrf.mxu0
        %v485 = vadd.f32 %v416, %v484
        %v486 = vpop.f32.mrf.mxu0
        %v487 = vpop.f32.mrf.mxu0
        %v488 = vadd.f32 %v421, %v487
        %v489 = vpop.f32.mrf.mxu0
        %490 = vmatprep.mubr.bf16.mxu0 0
        %491 = vmatmul.mubr.bf16.gmra.mxu0 %v448
        %v492 = vpop.f32.mrf.mxu0
        %v493 = vadd.f32 %v426, %v492
        %v494 = vpop.f32.mrf.mxu0
        %v495 = vpop.f32.mrf.mxu0
        %v496 = vadd.f32 %v431, %v495
        %v497 = vpop.f32.mrf.mxu0
        %498 = vdwg.mxu0
        %v499 = vmax.f32 %v485, 0.0
        %v500 = vmax.f32 %v488, 0.0
        %v501 = vmax.f32 %v493, 0.0
        %v502 = vmax.f32 %v496, 0.0
        %v503 = vld [vmem:[%s5] sm:$0x1]
        %v504 = vpack.c.bf16 %v500, %v499
        %v505 = vpack.c.bf16 %v502, %v501
        %v507 = vsel %vm443, %v503, 0
        %509 = vmatprep.subr.bf16.mxu0 0
        %510 = vmatpush1.bf16.msra.mxu0 0
        %511 = vmatprep.subr.bf16.mxu0 0
        %512 = vmatpush1.bf16.msra.mxu0 0
        %513 = vmatprep.subr.bf16.mxu0 0
        %514 = vmatpush1.bf16.msra.mxu0 0
        %515 = vmatprep.subr.bf16.mxu0 0
        %516 = vmatpush1.bf16.msra.mxu0 0
        %517 = vmatprep.subr.bf16.mxu0 0
        %518 = vmatpush1.bf16.msra.mxu0 0
        %519 = vmatprep.subr.bf16.mxu0 0
        %520 = vmatpush1.bf16.msra.mxu0 0
        %521 = vmatprep.subr.bf16.mxu0 0
        %522 = vmatpush1.bf16.msra.mxu0 %v505
        %523 = vmatprep.subr.bf16.mxu0 0
        %524 = vmatpush1.bf16.msra.mxu0 %v504
        %525 = vmatprep.subr.bf16.mxu0 0
        %526 = vmatpush2.bf16.msra.mxu0 0
        %527 = vmatprep.subr.bf16.mxu0 0
        %528 = vmatpush2.bf16.msra.mxu0 0
        %529 = vmatprep.subr.bf16.mxu0 0
        %530 = vmatpush2.bf16.msra.mxu0 0
        %531 = vmatprep.subr.bf16.mxu0 0
        %532 = vmatpush2.bf16.msra.mxu0 0
        %533 = vmatprep.subr.bf16.mxu0 0
        %534 = vmatpush2.bf16.msra.mxu0 0
        %535 = vmatprep.subr.bf16.mxu0 0
        %536 = vmatpush2.bf16.msra.mxu0 0
        %537 = vmatprep.subr.bf16.mxu0 0
        %538 = vmatpush2.bf16.msra.mxu0 0
        %539 = vmatprep.subr.bf16.mxu0 0
        %540 = vmatpush2.bf16.msra.mxu0 0
        %541 = vmatprep.mubr.bf16.mxu0 0
        %542 = vmatmul.mubr.bf16.gmra.mxu0 %v507
        %v543 = vpop.f32.mrf.mxu0
        %v544 = vadd.f32 0.0, %v543
        %v545 = vpop.f32.mrf.mxu0
        %v546 = vpop.f32.mrf.mxu0
        %v547 = vpop.f32.mrf.mxu0
        %548 = vdwg.mxu0
        %549 = vst [vmem:[%s295] sm:$0x1] %v544
        %s550 = sand.u32 %s159, 1
        %s551 = scalar_lea.sflag [#allocation4], %s550
        %s552 = sand.u32 %s159, 1
        %s553 = scalar_lea.vmem [#allocation3], %s552
        // Predicated region
        $region86: #{tpu_custom_call.1} parent=80 // pred_check
          %p554 = pneg %p169
        $region87: #{tpu_custom_call.1} parent=80 // pred_check_branch
          %556 = sbr.rel (%p554) target = $region89
        $region88: #{tpu_custom_call.1} parent=80 // pred_region
          %s558 = ssub.s32 16, 16
          %559 = vsyncadd %s551, %s558
          %s560 = smul.addr %s20, 16
          %s561 = scalar_lea.hbm %s6, %s560
          %s563 = sshll.u32 %s553, 4
          %s564 = int_to_ptr.vmem [resolvable:$true] %s563
          %566 = dma.vmem_to_hbm [thread:$0]  %s564, 16, %s561, %s551
        $region89: #{tpu_custom_call.1} parent=80 // pred_fallthru
          _
      $region81: #{tpu_custom_call.1} parent=5 // pred_fallthru
        _
      %p567 = scmp.le.s32.totalorder 2, %s15
      // Predicated region
      $region90: #{tpu_custom_call.1} parent=5 // pred_check
        %p568 = pneg %p567
      $region91: #{tpu_custom_call.1} parent=5 // pred_check_branch
        %570 = sbr.rel (%p568) target = $region93
      $region92: #{tpu_custom_call.1} parent=5 // pred_region
        %s571 = ssub.s32 %s15, 2
        // Predicated region
        $region94: #{tpu_custom_call.1} parent=92 // pred_check
          %p572 = pneg %p175
        $region95: #{tpu_custom_call.1} parent=92 // pred_check_branch
          %574 = sbr.rel (%p572) target = $region97
        $region96: #{tpu_custom_call.1} parent=92 // pred_region
          %s575 = sand.u32 %s160, 1
          %s576 = scalar_lea.sflag [#allocation4], %s575
          %s577 = sand.u32 %s160, 1
          %s578 = scalar_lea.vmem [#allocation3], %s577
          %579 = dma.done %s576, 16
        $region97: #{tpu_custom_call.1} parent=92 // pred_fallthru
          _
      $region93: #{tpu_custom_call.1} parent=5 // pred_fallthru
        _
    $region6: #{tpu_custom_call.1} parent=1 // loop_footer
      %s19 = sadd.s32 1, %s15
    $region7: #{tpu_custom_call.1} parent=1 // loop_footer_branch
      %14 = sbr.rel target = $region3
    $region8: #{tpu_custom_call.1} parent=1 // loop_exit
      _
    %580 = vsyncpa [#allocation4], 1
    %s581 = scalar_lea.sflag [#allocation4], 1
    %582 = vsyncpa %s581, 1

</llo_original>
